<compile_context>
chip_gen: v7x
topology: tpu7x:2x2x1
jax: 0.10.0
libtpu: 0.0.40
codegen_flags: <defaults>
</compile_context>

<pallas_src>
import functools

import jax
import jax.numpy as jnp
from jax.experimental import pallas as pl
from jax.experimental.pallas import tpu as pltpu

_LANE = 128


def _tpu_params():
    """Generation-aware tiling targets and VMEM budgets."""
    kind = ""
    try:
        dev = jax.devices()[0]
        if dev.platform == "tpu":
            kind = dev.device_kind.lower()
    except Exception:
        pass
    if "v7" in kind:
        # 2 TensorCores share the grid; 64 MiB VMEM per TC -> cap below physical.
        return dict(gen="v7", target_bytes=12 << 20, min_steps=4, vmem_cap=56 << 20)
    if "v6" in kind:
        return dict(gen="v6", target_bytes=8 << 20, min_steps=1, vmem_cap=96 << 20)
    if "v5 lite" in kind or "v5e" in kind or "v5lite" in kind:
        return dict(gen="v5e", target_bytes=6 << 20, min_steps=1, vmem_cap=96 << 20)
    # Unknown / older chips: conservative defaults.
    return dict(gen="other", target_bytes=4 << 20, min_steps=1, vmem_cap=64 << 20)


# ----------------------------------------------------------------------------
# Single-phase kernel: one (Bt, C, HW) slab per grid step.
# ----------------------------------------------------------------------------
def _channel_gate_kernel(x_ref, w1t_ref, b1_ref, w2t_ref, b2_ref, y_ref,
                         *, hw, apply_in_io_dtype):
    bt = x_ref.shape[0]

    # One fused streaming read feeds both pooling branches (fp32 accumulation).
    xf = x_ref[...].astype(jnp.float32)                   # (Bt, C, HW)
    s = jnp.sum(xf, axis=2)                                # (Bt, C)
    mx = jnp.max(xf, axis=2)                               # (Bt, C)
    avg = s * (1.0 / hw)

    # Shared 2-layer MLP on both pool branches with a single pair of dots.
    pooled = jnp.concatenate([avg, mx], axis=0)            # (2*Bt, C)
    h = jnp.dot(pooled, w1t_ref[...],
                preferred_element_type=jnp.float32) + b1_ref[...]   # (2*Bt, Ch)
    h = jnp.maximum(h, 0.0)
    o = jnp.dot(h, w2t_ref[...],
                preferred_element_type=jnp.float32) + b2_ref[...]   # (2*Bt, C)
    scale = jax.nn.sigmoid(o[:bt] + o[bt:])                # (Bt, C) fp32

    # Apply phase: re-read x from VMEM (fresh stream, low vreg pressure).
    if apply_in_io_dtype:
        # bf16 multiply path (v6e/v7x): no full-block fp32 up/down casts.
        y_ref[...] = x_ref[...] * scale.astype(y_ref.dtype)[:, :, None]
    else:
        y_ref[...] = (x_ref[...].astype(jnp.float32) * scale[:, :, None]
                      ).astype(y_ref.dtype)


# ----------------------------------------------------------------------------
# Two-phase fallback kernels (HW-tiled) for very large C*HW slabs.
# ----------------------------------------------------------------------------
def _pool_mlp_kernel(x_ref, w1t_ref, b1_ref, w2t_ref, b2_ref, scale_ref,
                     sum_sc, max_sc, *, hw, thw):
    t = pl.program_id(0)
    nt = pl.num_programs(0)

    @pl.when(t == 0)
    def _():
        sum_sc[...] = jnp.zeros(sum_sc.shape, jnp.float32)
        max_sc[...] = jnp.full(max_sc.shape, -jnp.inf, jnp.float32)

    xf = x_ref[...].astype(jnp.float32)                    # (B, C, thw)
    if hw % thw != 0:
        # Ragged last HW tile: mask out-of-range lanes.
        lane = jax.lax.broadcasted_iota(jnp.int32, xf.shape, 2) + t * thw
        valid = lane < hw
        xs = jnp.where(valid, xf, 0.0)
        xm = jnp.where(valid, xf, -jnp.inf)
    else:
        xs = xf
        xm = xf

    sum_sc[...] = sum_sc[...] + jnp.sum(xs, axis=2)
    max_sc[...] = jnp.maximum(max_sc[...], jnp.max(xm, axis=2))

    @pl.when(t == nt - 1)
    def _():
        b = sum_sc.shape[0]
        avg = sum_sc[...] * (1.0 / hw)
        pooled = jnp.concatenate([avg, max_sc[...]], axis=0)        # (2B, C)
        h = jnp.dot(pooled, w1t_ref[...],
                    preferred_element_type=jnp.float32) + b1_ref[...]
        h = jnp.maximum(h, 0.0)
        o = jnp.dot(h, w2t_ref[...],
                    preferred_element_type=jnp.float32) + b2_ref[...]
        scale_ref[...] = jax.nn.sigmoid(o[:b] + o[b:])


def _apply_kernel(scale_ref, x_ref, y_ref, *, apply_in_io_dtype):
    if apply_in_io_dtype:
        y_ref[...] = x_ref[...] * scale_ref[...].astype(y_ref.dtype)[:, :, None]
    else:
        y_ref[...] = (x_ref[...].astype(jnp.float32)
                      * scale_ref[...][:, :, None]).astype(y_ref.dtype)


# ----------------------------------------------------------------------------
# Tiling helpers.
# ----------------------------------------------------------------------------
def _pick_bt(B, C, HW, itemsize, target_bytes, min_steps):
    """Largest Bt whose block fits the target; on v7x keep >= min_steps grid steps."""
    row_bytes = max(1, C * HW * itemsize)
    bt = max(1, min(B, target_bytes // row_bytes))
    if min_steps > 1 and B > 1:
        # cdiv(B, bt) >= min_steps  <=>  bt <= floor((B-1)/(min_steps-1))
        bt = min(bt, max(1, (B - 1) // (min_steps - 1)))
    return int(bt)


def _pick_hw_tile(B, C, HW, itemsize, target_bytes):
    per_col = max(1, B * C * itemsize)
    thw = (target_bytes // per_col) // _LANE * _LANE
    thw = max(_LANE, thw)
    return int(min(HW, thw))


# ----------------------------------------------------------------------------
# Wrapper.
# ----------------------------------------------------------------------------
def channel_gate(x, w1, b1, w2, b2, *, bt=None, force_two_phase=False, hw_tile=None):
    """x: (B, C, H, W).  w1: (Ch, C), b1: (Ch,), w2: (C, Ch), b2: (C,).
    Output has the same dtype as x; internal compute is fp32."""
    B, C, H, W = x.shape
    HW = H * W
    Ch = w1.shape[0]
    dtype = x.dtype
    itemsize = jnp.dtype(dtype).itemsize

    params = _tpu_params()
    apply_in_io_dtype = (dtype == jnp.bfloat16) and params["gen"] in ("v6", "v7")

    xr = x.reshape(B, C, HW)

    # Weights in row-matmul form, fp32 (tiny, broadcast once).
    w1t = w1.T.astype(jnp.float32)              # (C, Ch)
    w2t = w2.T.astype(jnp.float32)              # (Ch, C)
    b1r = b1.reshape(1, Ch).astype(jnp.float32)
    b2r = b2.reshape(1, C).astype(jnp.float32)
    weight_bytes = (w1t.size + w2t.size + b1r.size + b2r.size) * 4

    # Dispatch: if even a Bt=1 slab can't be double-buffered within the VMEM
    # cap, fall back to the two-phase HW-tiled path.
    single_row_bytes = C * HW * itemsize
    use_two_phase = force_two_phase or (single_row_bytes > params["vmem_cap"] // 6)

    if not use_two_phase:
        bt_ = _pick_bt(B, C, HW, itemsize, params["target_bytes"],
                       params["min_steps"]) if bt is None else int(min(bt, B))
        grid = (pl.cdiv(B, bt_),)
        block_bytes = bt_ * C * HW * itemsize
        vmem_limit = int(min(max(4 * block_bytes + weight_bytes + (2 << 20), 8 << 20),
                             params["vmem_cap"]))
        cost = pl.CostEstimate(
            flops=int(4 * 2 * B * C * Ch + 3 * B * C * HW),
            transcendentals=int(B * C),
            bytes_accessed=int(2 * B * C * HW * itemsize + weight_bytes),
        )
        kernel = functools.partial(_channel_gate_kernel, hw=HW,
                                   apply_in_io_dtype=apply_in_io_dtype)
        out = pl.pallas_call(
            kernel,
            out_shape=jax.ShapeDtypeStruct((B, C, HW), dtype),
            grid_spec=pltpu.PrefetchScalarGridSpec(
                num_scalar_prefetch=0,
                grid=grid,
                in_specs=[
                    pl.BlockSpec((bt_, C, HW), lambda g: (g, 0, 0)),
                    pl.BlockSpec((C, Ch), lambda g: (0, 0)),
                    pl.BlockSpec((1, Ch), lambda g: (0, 0)),
                    pl.BlockSpec((Ch, C), lambda g: (0, 0)),
                    pl.BlockSpec((1, C), lambda g: (0, 0)),
                ],
                out_specs=pl.BlockSpec((bt_, C, HW), lambda g: (g, 0, 0)),
            ),
            compiler_params=pltpu.CompilerParams(
                dimension_semantics=("parallel",),
                vmem_limit_bytes=vmem_limit,
            ),
            cost_estimate=cost,
        )(xr, w1t, b1r, w2t, b2r)
        return out.reshape(B, C, H, W)

    # ---------------- two-phase HW-tiled fallback ----------------
    thw = _pick_hw_tile(B, C, HW, itemsize, params["target_bytes"]) \
        if hw_tile is None else int(min(hw_tile, HW))
    if thw < HW:
        thw = max(_LANE, (thw // _LANE) * _LANE)   # lane-aligned unless full extent
    n_hw = pl.cdiv(HW, thw)
    block_bytes = B * C * thw * itemsize

    # Pass 1: pooled sum/max accumulated in VMEM scratch, MLP+sigmoid on last tile.
    pool_vmem = int(min(max(3 * block_bytes + weight_bytes + 4 * B * C * 4 + (2 << 20),
                            8 << 20), params["vmem_cap"]))
    pool_kernel = functools.partial(_pool_mlp_kernel, hw=HW, thw=thw)
    scale = pl.pallas_call(
        pool_kernel,
        out_shape=jax.ShapeDtypeStruct((B, C), jnp.float32),
        grid_spec=pltpu.PrefetchScalarGridSpec(
            num_scalar_prefetch=0,
            grid=(n_hw,),
            in_specs=[
                pl.BlockSpec((B, C, thw), lambda t: (0, 0, t)),
                pl.BlockSpec((C, Ch), lambda t: (0, 0)),
                pl.BlockSpec((1, Ch), lambda t: (0, 0)),
                pl.BlockSpec((Ch, C), lambda t: (0, 0)),
                pl.BlockSpec((1, C), lambda t: (0, 0)),
            ],
            out_specs=pl.BlockSpec((B, C), lambda t: (0, 0)),
            scratch_shapes=[pltpu.VMEM((B, C), jnp.float32),
                            pltpu.VMEM((B, C), jnp.float32)],
        ),
        compiler_params=pltpu.CompilerParams(
            dimension_semantics=("arbitrary",),
            vmem_limit_bytes=pool_vmem,
        ),
        cost_estimate=pl.CostEstimate(
            flops=int(4 * 2 * B * C * Ch + 2 * B * C * HW),
            transcendentals=int(B * C),
            bytes_accessed=int(B * C * HW * itemsize + weight_bytes),
        ),
    )(xr, w1t, b1r, w2t, b2r)

    # Pass 2: re-stream x applying the (B, C) scale.
    apply_vmem = int(min(max(4 * block_bytes + B * C * 4 + (2 << 20), 8 << 20),
                         params["vmem_cap"]))
    apply_kernel = functools.partial(_apply_kernel,
                                     apply_in_io_dtype=apply_in_io_dtype)
    out = pl.pallas_call(
        apply_kernel,
        out_shape=jax.ShapeDtypeStruct((B, C, HW), dtype),
        grid_spec=pltpu.PrefetchScalarGridSpec(
            num_scalar_prefetch=0,
            grid=(n_hw,),
            in_specs=[
                pl.BlockSpec((B, C), lambda t: (0, 0)),
                pl.BlockSpec((B, C, thw), lambda t: (0, 0, t)),
            ],
            out_specs=pl.BlockSpec((B, C, thw), lambda t: (0, 0, t)),
        ),
        compiler_params=pltpu.CompilerParams(
            dimension_semantics=("parallel",),
            vmem_limit_bytes=apply_vmem,
        ),
        cost_estimate=pl.CostEstimate(
            flops=int(B * C * HW),
            transcendentals=0,
            bytes_accessed=int(2 * B * C * HW * itemsize),
        ),
    )(scale, xr)
    return out.reshape(B, C, H, W)


def channel_gate_ref(x, w1, b1, w2, b2):
    # Pure-JAX fp32 reference matching the PyTorch forward (pool_types=['avg','max']).
    xf = x.astype(jnp.float32)
    avg = xf.mean(axis=(2, 3))                 # (B, C)
    mx = xf.max(axis=(2, 3))                   # (B, C)

    def mlp(p):
        h = jnp.maximum(p @ w1.T + b1, 0.0)
        return h @ w2.T + b2

    att = mlp(avg) + mlp(mx)                   # (B, C)
    scale = jax.nn.sigmoid(att)[:, :, None, None]
    return xf * scale


# TODO(synk): 'lp' and 'lse' pool_types of the original module are not needed by
# the default configuration (['avg', 'max']) and are not implemented here.

if __name__ == "__main__":
    # Small shapes consistent with the module: gate_channels=32, reduction=16.
    B, C, H, W = 4, 32, 16, 16
    reduction_ratio = 16
    Ch = C // reduction_ratio  # hidden width of the MLP

    key = jax.random.PRNGKey(0)
    kx, k1, k2, k3, k4 = jax.random.split(key, 5)

    x = jax.random.normal(kx, (B, C, H, W), dtype=jnp.float32)

    lim1 = 1.0 / jnp.sqrt(C)
    lim2 = 1.0 / jnp.sqrt(Ch)
    w1 = jax.random.uniform(k1, (Ch, C), minval=-lim1, maxval=lim1, dtype=jnp.float32)
    b1 = jax.random.uniform(k2, (Ch,), minval=-lim1, maxval=lim1, dtype=jnp.float32)
    w2 = jax.random.uniform(k3, (C, Ch), minval=-lim2, maxval=lim2, dtype=jnp.float32)
    b2 = jax.random.uniform(k4, (C,), minval=-lim2, maxval=lim2, dtype=jnp.float32)

    # 1) fp32, single-phase path.
    y = jax.block_until_ready(channel_gate(x, w1, b1, w2, b2))
    y_ref = channel_gate_ref(x, w1, b1, w2, b2)
    assert y.dtype == x.dtype
    assert jnp.allclose(y, y_ref, atol=1e-5, rtol=1e-5), "fp32 mismatch vs reference"

    # 2) bf16 I/O (native-dtype wire; bf16 apply on v6e/v7x, fp32 elsewhere).
    x_bf = x.astype(jnp.bfloat16)
    y_bf = jax.block_until_ready(channel_gate(x_bf, w1, b1, w2, b2))
    y_bf_ref = channel_gate_ref(x_bf, w1, b1, w2, b2)
    assert y_bf.dtype == jnp.bfloat16
    assert jnp.allclose(y_bf.astype(jnp.float32), y_bf_ref, atol=5e-2, rtol=5e-2), \
        "bf16 mismatch vs reference"

    # 3) non-128-multiple spatial size (14x14) -- no wrapper pad/slice round trip.
    x2 = jax.random.normal(jax.random.PRNGKey(1), (2, C, 14, 14), dtype=jnp.float32)
    y2 = jax.block_until_ready(channel_gate(x2, w1, b1, w2, b2))
    assert jnp.allclose(y2, channel_gate_ref(x2, w1, b1, w2, b2),
                        atol=1e-5, rtol=1e-5), "padded-HW mismatch vs reference"

    # 4) ragged batch tiling (Bt does not divide B): cdiv grid, OOB rows isolated.
    x3 = jax.random.normal(jax.random.PRNGKey(2), (5, C, 16, 16), dtype=jnp.float32)
    y3 = jax.block_until_ready(channel_gate(x3, w1, b1, w2, b2, bt=2))
    assert jnp.allclose(y3, channel_gate_ref(x3, w1, b1, w2, b2),
                        atol=1e-5, rtol=1e-5), "ragged-batch mismatch vs reference"

    # 5) two-phase HW-tiled fallback (forced at small shape), incl. ragged HW tail.
    x4 = jax.random.normal(jax.random.PRNGKey(3), (2, C, 14, 14), dtype=jnp.float32)
    y4 = jax.block_until_ready(
        channel_gate(x4, w1, b1, w2, b2, force_two_phase=True, hw_tile=128))
    assert jnp.allclose(y4, channel_gate_ref(x4, w1, b1, w2, b2),
                        atol=1e-5, rtol=1e-5), "two-phase mismatch vs reference"

    print("KERNEL_OK")
</pallas_src>

<mosaic_0001>
module attributes {stable_mosaic.version = 11 : i64} {
  func.func @_channel_gate_kernel(%arg0: i32, %arg1: memref<4x32x256xf32, #tpu.memory_space<vmem>>, %arg2: memref<32x2xf32, #tpu.memory_space<vmem>>, %arg3: memref<1x2xf32, #tpu.memory_space<vmem>>, %arg4: memref<2x32xf32, #tpu.memory_space<vmem>>, %arg5: memref<1x32xf32, #tpu.memory_space<vmem>>, %arg6: memref<4x32x256xf32, #tpu.memory_space<vmem>>) attributes {dimension_semantics = [#tpu.dimension_semantics<parallel>], iteration_bounds = array<i64: 1>, scalar_prefetch = 0 : i64, scratch_operands = 0 : i64, tpu.core_type = #tpu.core_type<tc>, window_params = [{transform_indices = @transform_0, window_bounds = array<i64: 4, 32, 256>}, {pipeline_mode = #tpu.pipeline_mode<synchronous>, transform_indices = @transform_1, window_bounds = array<i64: 32, 2>}, {pipeline_mode = #tpu.pipeline_mode<synchronous>, transform_indices = @transform_2, window_bounds = array<i64: 1, 2>}, {pipeline_mode = #tpu.pipeline_mode<synchronous>, transform_indices = @transform_3, window_bounds = array<i64: 2, 32>}, {pipeline_mode = #tpu.pipeline_mode<synchronous>, transform_indices = @transform_4, window_bounds = array<i64: 1, 32>}, {transform_indices = @transform_5, window_bounds = array<i64: 4, 32, 256>}]} {
    %c0 = arith.constant 0 : index
    %c0_0 = arith.constant 0 : index
    %c0_1 = arith.constant 0 : index
    %0 = vector.load %arg1[%c0, %c0_0, %c0_1] : memref<4x32x256xf32, #tpu.memory_space<vmem>>, vector<4x32x256xf32>
    %cst = arith.constant dense<0.000000e+00> : vector<4x32xf32>
    %1 = vector.multi_reduction <add>, %0, %cst [2] : vector<4x32x256xf32> to vector<4x32xf32>
    %cst_2 = arith.constant dense<0xFF800000> : vector<4x32xf32>
    %2 = vector.multi_reduction <maximumf>, %0, %cst_2 [2] : vector<4x32x256xf32> to vector<4x32xf32>
    %cst_3 = arith.constant 3.906250e-03 : f32
    %3 = vector.broadcast %cst_3 : f32 to vector<4x32xf32>
    %4 = arith.mulf %1, %3 : vector<4x32xf32>
    %5 = tpu.concatenate %4, %2 in 0 : vector<4x32xf32>, vector<4x32xf32> -> vector<8x32xf32>
    %c0_4 = arith.constant 0 : index
    %c0_5 = arith.constant 0 : index
    %6 = vector.load %arg2[%c0_4, %c0_5] : memref<32x2xf32, #tpu.memory_space<vmem>>, vector<32x2xf32>
    %cst_6 = arith.constant dense<0.000000e+00> : vector<8x2xf32>
    %7 = tpu.matmul %5, %6, %cst_6 {dimension_numbers = #tpu.dot_dimension_numbers<[1], [0], [0], [1], [0, 0, 1, 1], [], []>} : vector<8x32xf32>, vector<32x2xf32>, vector<8x2xf32> -> vector<8x2xf32>
    %c0_7 = arith.constant 0 : index
    %c0_8 = arith.constant 0 : index
    %8 = vector.load %arg3[%c0_7, %c0_8] : memref<1x2xf32, #tpu.memory_space<vmem>>, vector<1x2xf32>
    %9 = vector.broadcast %8 : vector<1x2xf32> to vector<8x2xf32>
    %10 = arith.addf %7, %9 : vector<8x2xf32>
    %cst_9 = arith.constant 0.000000e+00 : f32
    %11 = vector.broadcast %cst_9 : f32 to vector<8x2xf32>
    %12 = arith.maximumf %10, %11 : vector<8x2xf32>
    %c0_10 = arith.constant 0 : index
    %c0_11 = arith.constant 0 : index
    %13 = vector.load %arg4[%c0_10, %c0_11] : memref<2x32xf32, #tpu.memory_space<vmem>>, vector<2x32xf32>
    %cst_12 = arith.constant dense<0.000000e+00> : vector<8x32xf32>
    %14 = tpu.matmul %12, %13, %cst_12 {dimension_numbers = #tpu.dot_dimension_numbers<[1], [0], [0], [1], [0, 0, 1, 1], [], []>} : vector<8x2xf32>, vector<2x32xf32>, vector<8x32xf32> -> vector<8x32xf32>
    %c0_13 = arith.constant 0 : index
    %c0_14 = arith.constant 0 : index
    %15 = vector.load %arg5[%c0_13, %c0_14] : memref<1x32xf32, #tpu.memory_space<vmem>>, vector<1x32xf32>
    %16 = vector.broadcast %15 : vector<1x32xf32> to vector<8x32xf32>
    %17 = arith.addf %14, %16 : vector<8x32xf32>
    %18 = vector.extract_strided_slice %17 {offsets = [0, 0], sizes = [4, 32], strides = [1, 1]} : vector<8x32xf32> to vector<4x32xf32>
    %19 = vector.extract_strided_slice %17 {offsets = [4, 0], sizes = [4, 32], strides = [1, 1]} : vector<8x32xf32> to vector<4x32xf32>
    %20 = arith.addf %18, %19 : vector<4x32xf32>
    %21 = arith.negf %20 : vector<4x32xf32>
    %22 = math.exp %21 : vector<4x32xf32>
    %cst_15 = arith.constant 1.000000e+00 : f32
    %23 = vector.broadcast %cst_15 : f32 to vector<4x32xf32>
    %24 = arith.addf %23, %22 : vector<4x32xf32>
    %25 = arith.divf %23, %24 : vector<4x32xf32>
    %c0_16 = arith.constant 0 : index
    %c0_17 = arith.constant 0 : index
    %c0_18 = arith.constant 0 : index
    %26 = vector.load %arg1[%c0_16, %c0_17, %c0_18] : memref<4x32x256xf32, #tpu.memory_space<vmem>>, vector<4x32x256xf32>
    %27 = vector.shape_cast %25 : vector<4x32xf32> to vector<4x32x1xf32>
    %28 = vector.broadcast %27 : vector<4x32x1xf32> to vector<4x32x256xf32>
    %29 = arith.mulf %26, %28 : vector<4x32x256xf32>
    %c0_19 = arith.constant 0 : index
    %c0_20 = arith.constant 0 : index
    %c0_21 = arith.constant 0 : index
    %30 = vector.load %arg6[%c0_19, %c0_20, %c0_21] : memref<4x32x256xf32, #tpu.memory_space<vmem>>, vector<4x32x256xf32>
    tpu.vector_store %arg6[%c0_19, %c0_20, %c0_21], %29 {strides = array<i32>} : memref<4x32x256xf32, #tpu.memory_space<vmem>>, vector<4x32x256xf32>,
    return
  }
  func.func @transform_0(%arg0: i32) -> (i32, i32, i32) {
    %c0_i32 = arith.constant 0 : i32
    %c0_i32_0 = arith.constant 0 : i32
    %c0_i32_1 = arith.constant 0 : i32
    return %arg0, %c0_i32, %c0_i32_0 : i32, i32, i32
  }
  func.func @transform_1(%arg0: i32) -> (i32, i32) {
    %c0_i32 = arith.constant 0 : i32
    %c0_i32_0 = arith.constant 0 : i32
    %c0_i32_1 = arith.constant 0 : i32
    return %c0_i32, %c0_i32_0 : i32, i32
  }
  func.func @transform_2(%arg0: i32) -> (i32, i32) {
    %c0_i32 = arith.constant 0 : i32
    %c0_i32_0 = arith.constant 0 : i32
    %c0_i32_1 = arith.constant 0 : i32
    return %c0_i32, %c0_i32_0 : i32, i32
  }
  func.func @transform_3(%arg0: i32) -> (i32, i32) {
    %c0_i32 = arith.constant 0 : i32
    %c0_i32_0 = arith.constant 0 : i32
    %c0_i32_1 = arith.constant 0 : i32
    return %c0_i32, %c0_i32_0 : i32, i32
  }
  func.func @transform_4(%arg0: i32) -> (i32, i32) {
    %c0_i32 = arith.constant 0 : i32
    %c0_i32_0 = arith.constant 0 : i32
    %c0_i32_1 = arith.constant 0 : i32
    return %c0_i32, %c0_i32_0 : i32, i32
  }
  func.func @transform_5(%arg0: i32) -> (i32, i32, i32) {
    %c0_i32 = arith.constant 0 : i32
    %c0_i32_0 = arith.constant 0 : i32
    %c0_i32_1 = arith.constant 0 : i32
    return %arg0, %c0_i32, %c0_i32_0 : i32, i32, i32
  }
}

</mosaic_0001>

<llo_original>
// kernel: tpu_custom_call.1
$region0: #{tpu_custom_call.1}
  #allocation0 [shape = 'u32[]', space=smem, size = 0x4, offset = 0x4, fixed_abs, tag = 'smem constant byte address 0x4 - core index']
  #allocation1 [shape = 'u32[144,128]{1,0:T(1,128)}', space=vmem, size = 0x12000, scoped, tag = 'internal scratch']
  %s0 = inlined_call_operand.hbm [shape: f32[4,32,256], index: 0, kind: input, shape index: {}]
  %s1 = inlined_call_operand.vmem [shape: f32[32,2], index: 1, kind: input, shape index: {}]
  %s2 = inlined_call_operand.vmem [shape: f32[1,2], index: 2, kind: input, shape index: {}]
  %s3 = inlined_call_operand.vmem [shape: f32[2,32], index: 3, kind: input, shape index: {}]
  %s4 = inlined_call_operand.vmem [shape: f32[1,32], index: 4, kind: input, shape index: {}]
  %s5 = inlined_call_operand.hbm [shape: f32[4,32,256], index: 5, kind: output, shape index: {}]
  %s6 = sld [smem:[#allocation0]]
  $region34: #{tpu_custom_call.1} parent=0
    _
  %s8 = ssub.s32 1, %s6
  %s9 = scalar_select 0, %s8, %s6
  $region1: #{tpu_custom_call.1} parent=0
    #allocation2 [shape = 'u8[131072]{0}', space=vmem, size = 0x20000, scoped, tag = 'input window, operand 0, single buffered']
    #allocation3 [shape = 's32[1]{0}', space=sflag, size = 0x4, scoped, tag = 'scoped memory for tpu_custom_call.1']
    #allocation4 [shape = 's32[1]{0}', space=sflag, size = 0x4, scoped, tag = 'scoped memory for tpu_custom_call.1']
    #allocation5 [shape = 'u8[131072]{0}', space=vmem, size = 0x20000, scoped, tag = 'output window, operand 0, single buffered']
    %10 = vsyncpa [#allocation3], 0
    %11 = vsyncpa [#allocation4], 0
    // Predicated region
    $region2: #{tpu_custom_call.1} parent=1 // pred_check
      _
    $region3: #{tpu_custom_call.1} parent=1 // pred_check_branch
      %13 = sbr.rel (0) target = $region5
    $region4: #{tpu_custom_call.1} parent=1 // pred_region
      %s15 = ssub.s32 4096, 4096
      %16 = vsyncadd [#allocation3], %s15
      %s17 = sshll.u32 [#allocation2], 4
      %s18 = int_to_ptr.vmem [resolvable:$true] %s17
      %23 = dma.hbm_to_vmem [thread:$0]  %s0, 4096, %s18, [#allocation3], 256, 256, 16
    $region5: #{tpu_custom_call.1} parent=1 // pred_fallthru
      _
    // Predicated region
    $region6: #{tpu_custom_call.1} parent=1 // pred_check
      _
    $region7: #{tpu_custom_call.1} parent=1 // pred_check_branch
      %25 = sbr.rel (0) target = $region9
    $region8: #{tpu_custom_call.1} parent=1 // pred_region
      _
    $region9: #{tpu_custom_call.1} parent=1 // pred_fallthru
      _
    // Predicated region
    $region10: #{tpu_custom_call.1} parent=1 // pred_check
      _
    $region11: #{tpu_custom_call.1} parent=1 // pred_check_branch
      %27 = sbr.rel (0) target = $region13
    $region12: #{tpu_custom_call.1} parent=1 // pred_region
      _
    $region13: #{tpu_custom_call.1} parent=1 // pred_fallthru
      _
    // Predicated region
    $region14: #{tpu_custom_call.1} parent=1 // pred_check
      _
    $region15: #{tpu_custom_call.1} parent=1 // pred_check_branch
      %29 = sbr.rel (0) target = $region17
    $region16: #{tpu_custom_call.1} parent=1 // pred_region
      _
    $region17: #{tpu_custom_call.1} parent=1 // pred_fallthru
      _
    // Predicated region
    $region18: #{tpu_custom_call.1} parent=1 // pred_check
      _
    $region19: #{tpu_custom_call.1} parent=1 // pred_check_branch
      %31 = sbr.rel (0) target = $region21
    $region20: #{tpu_custom_call.1} parent=1 // pred_region
      _
    $region21: #{tpu_custom_call.1} parent=1 // pred_fallthru
      _
    // Predicated region
    $region22: #{tpu_custom_call.1} parent=1 // pred_check
      _
    $region23: #{tpu_custom_call.1} parent=1 // pred_check_branch
      %33 = sbr.rel (0) target = $region25
    $region24: #{tpu_custom_call.1} parent=1 // pred_region
      %34 = dma.done [#allocation3], 4096
    $region25: #{tpu_custom_call.1} parent=1 // pred_fallthru
      _
    %v35 = vld [vmem:[#allocation2] sm:$0xff]
    %v36 = vld [vmem:[#allocation2 + $0x8] sm:$0xff]
    %v37 = vld [vmem:[#allocation2 + $0x10] sm:$0xff]
    %v38 = vld [vmem:[#allocation2 + $0x18] sm:$0xff]
    %v39 = vld [vmem:[#allocation2 + $0x20] sm:$0xff]
    %v40 = vld [vmem:[#allocation2 + $0x28] sm:$0xff]
    %v41 = vld [vmem:[#allocation2 + $0x30] sm:$0xff]
    %v42 = vld [vmem:[#allocation2 + $0x38] sm:$0xff]
    %v43 = vld [vmem:[#allocation2 + $0x40] sm:$0xff]
    %v44 = vld [vmem:[#allocation2 + $0x48] sm:$0xff]
    %v45 = vld [vmem:[#allocation2 + $0x50] sm:$0xff]
    %v46 = vld [vmem:[#allocation2 + $0x58] sm:$0xff]
    %v47 = vld [vmem:[#allocation2 + $0x60] sm:$0xff]
    %v48 = vld [vmem:[#allocation2 + $0x68] sm:$0xff]
    %v49 = vld [vmem:[#allocation2 + $0x70] sm:$0xff]
    %v50 = vld [vmem:[#allocation2 + $0x78] sm:$0xff]
    %v51 = vld [vmem:[#allocation2 + $0x80] sm:$0xff]
    %v52 = vld [vmem:[#allocation2 + $0x88] sm:$0xff]
    %v53 = vld [vmem:[#allocation2 + $0x90] sm:$0xff]
    %v54 = vld [vmem:[#allocation2 + $0x98] sm:$0xff]
    %v55 = vld [vmem:[#allocation2 + $0xa0] sm:$0xff]
    %v56 = vld [vmem:[#allocation2 + $0xa8] sm:$0xff]
    %v57 = vld [vmem:[#allocation2 + $0xb0] sm:$0xff]
    %v58 = vld [vmem:[#allocation2 + $0xb8] sm:$0xff]
    %v59 = vld [vmem:[#allocation2 + $0xc0] sm:$0xff]
    %v60 = vld [vmem:[#allocation2 + $0xc8] sm:$0xff]
    %v61 = vld [vmem:[#allocation2 + $0xd0] sm:$0xff]
    %v62 = vld [vmem:[#allocation2 + $0xd8] sm:$0xff]
    %v63 = vld [vmem:[#allocation2 + $0xe0] sm:$0xff]
    %v64 = vld [vmem:[#allocation2 + $0xe8] sm:$0xff]
    %v65 = vld [vmem:[#allocation2 + $0xf0] sm:$0xff]
    %v66 = vld [vmem:[#allocation2 + $0xf8] sm:$0xff]
    %v67 = vadd.f32 %v35, %v36
    %68 = vadd.xlane.f32.xlu0 %v67
    %v69 = vpop.xlane.xlu0 %68
    %v70 = vadd.f32 %v37, %v38
    %71 = vadd.xlane.f32.xlu0 %v70
    %v72 = vpop.xlane.xlu0 %71
    %v73 = vadd.f32 %v39, %v40
    %74 = vadd.xlane.f32.xlu0 %v73
    %v75 = vpop.xlane.xlu0 %74
    %v76 = vadd.f32 %v41, %v42
    %77 = vadd.xlane.f32.xlu0 %v76
    %v78 = vpop.xlane.xlu0 %77
    %v79 = vadd.f32 %v43, %v44
    %80 = vadd.xlane.f32.xlu0 %v79
    %v81 = vpop.xlane.xlu0 %80
    %v82 = vadd.f32 %v45, %v46
    %83 = vadd.xlane.f32.xlu0 %v82
    %v84 = vpop.xlane.xlu0 %83
    %v85 = vadd.f32 %v47, %v48
    %86 = vadd.xlane.f32.xlu0 %v85
    %v87 = vpop.xlane.xlu0 %86
    %v88 = vadd.f32 %v49, %v50
    %89 = vadd.xlane.f32.xlu0 %v88
    %v90 = vpop.xlane.xlu0 %89
    %v91 = vadd.f32 %v51, %v52
    %92 = vadd.xlane.f32.xlu0 %v91
    %v93 = vpop.xlane.xlu0 %92
    %v94 = vadd.f32 %v53, %v54
    %95 = vadd.xlane.f32.xlu0 %v94
    %v96 = vpop.xlane.xlu0 %95
    %v97 = vadd.f32 %v55, %v56
    %98 = vadd.xlane.f32.xlu0 %v97
    %v99 = vpop.xlane.xlu0 %98
    %v100 = vadd.f32 %v57, %v58
    %101 = vadd.xlane.f32.xlu0 %v100
    %v102 = vpop.xlane.xlu0 %101
    %v103 = vadd.f32 %v59, %v60
    %104 = vadd.xlane.f32.xlu0 %v103
    %v105 = vpop.xlane.xlu0 %104
    %v106 = vadd.f32 %v61, %v62
    %107 = vadd.xlane.f32.xlu0 %v106
    %v108 = vpop.xlane.xlu0 %107
    %v109 = vadd.f32 %v63, %v64
    %110 = vadd.xlane.f32.xlu0 %v109
    %v111 = vpop.xlane.xlu0 %110
    %v112 = vadd.f32 %v65, %v66
    %113 = vadd.xlane.f32.xlu0 %v112
    %v114 = vpop.xlane.xlu0 %113
    %v115 = vmax.f32 %v35, %v36
    %116 = vmax.xlane.f32.xlu0 %v115
    %v117 = vpop.xlane.xlu0 %116
    %v118 = vmax.f32 %v37, %v38
    %119 = vmax.xlane.f32.xlu0 %v118
    %v120 = vpop.xlane.xlu0 %119
    %v121 = vmax.f32 %v39, %v40
    %122 = vmax.xlane.f32.xlu0 %v121
    %v123 = vpop.xlane.xlu0 %122
    %v124 = vmax.f32 %v41, %v42
    %125 = vmax.xlane.f32.xlu0 %v124
    %v126 = vpop.xlane.xlu0 %125
    %v127 = vmax.f32 %v43, %v44
    %128 = vmax.xlane.f32.xlu0 %v127
    %v129 = vpop.xlane.xlu0 %128
    %v130 = vmax.f32 %v45, %v46
    %131 = vmax.xlane.f32.xlu0 %v130
    %v132 = vpop.xlane.xlu0 %131
    %v133 = vmax.f32 %v47, %v48
    %134 = vmax.xlane.f32.xlu0 %v133
    %v135 = vpop.xlane.xlu0 %134
    %v136 = vmax.f32 %v49, %v50
    %137 = vmax.xlane.f32.xlu0 %v136
    %v138 = vpop.xlane.xlu0 %137
    %v139 = vmax.f32 %v51, %v52
    %140 = vmax.xlane.f32.xlu0 %v139
    %v141 = vpop.xlane.xlu0 %140
    %v142 = vmax.f32 %v53, %v54
    %143 = vmax.xlane.f32.xlu0 %v142
    %v144 = vpop.xlane.xlu0 %143
    %v145 = vmax.f32 %v55, %v56
    %146 = vmax.xlane.f32.xlu0 %v145
    %v147 = vpop.xlane.xlu0 %146
    %v148 = vmax.f32 %v57, %v58
    %149 = vmax.xlane.f32.xlu0 %v148
    %v150 = vpop.xlane.xlu0 %149
    %v151 = vmax.f32 %v59, %v60
    %152 = vmax.xlane.f32.xlu0 %v151
    %v153 = vpop.xlane.xlu0 %152
    %v154 = vmax.f32 %v61, %v62
    %155 = vmax.xlane.f32.xlu0 %v154
    %v156 = vpop.xlane.xlu0 %155
    %v157 = vmax.f32 %v63, %v64
    %158 = vmax.xlane.f32.xlu0 %v157
    %v159 = vpop.xlane.xlu0 %158
    %v160 = vmax.f32 %v65, %v66
    %161 = vmax.xlane.f32.xlu0 %v160
    %v162 = vpop.xlane.xlu0 %161
    %v163 = vmul.f32 %v69, 0.00390625
    %v164 = vmul.f32 %v72, 0.00390625
    %v165 = vmul.f32 %v75, 0.00390625
    %v166 = vmul.f32 %v78, 0.00390625
    %v167 = vmul.f32 %v81, 0.00390625
    %v168 = vmul.f32 %v84, 0.00390625
    %v169 = vmul.f32 %v87, 0.00390625
    %v170 = vmul.f32 %v90, 0.00390625
    %v171 = vmul.f32 %v93, 0.00390625
    %v172 = vmul.f32 %v96, 0.00390625
    %v173 = vmul.f32 %v99, 0.00390625
    %v174 = vmul.f32 %v102, 0.00390625
    %v175 = vmul.f32 %v105, 0.00390625
    %v176 = vmul.f32 %v108, 0.00390625
    %v177 = vmul.f32 %v111, 0.00390625
    %v178 = vmul.f32 %v114, 0.00390625
    %v195 = vlaneseq
    %v196 = vand.u32 %v195, 127
    %v197 = vlaneseq
    %v198 = vshrl.u32 %v197, 7
    %v199 = vsub.s32 %v196, %v198
    %v200 = vrot.slane %v163, %v199
    %v201 = vadd.s32 %v196, 4294967288
    %v202 = vlaneseq
    %v203 = vshrl.u32 %v202, 7
    %v204 = vsub.s32 %v201, %v203
    %v205 = vrot.slane %v164, %v204
    %vm206 = vcmask 130112
    %v207 = vsel %vm206, %v205, %v200
    %v208 = vadd.s32 %v196, 4294967280
    %v209 = vlaneseq
    %v210 = vshrl.u32 %v209, 7
    %v211 = vsub.s32 %v208, %v210
    %v212 = vrot.slane %v165, %v211
    %vm213 = vcmask 195712
    %v214 = vsel %vm213, %v212, %v207
    %v215 = vadd.s32 %v196, 4294967272
    %v216 = vlaneseq
    %v217 = vshrl.u32 %v216, 7
    %v218 = vsub.s32 %v215, %v217
    %v219 = vrot.slane %v166, %v218
    %vm220 = vcmask 261312
    %v221 = vsel %vm220, %v219, %v214
    %v222 = vlaneseq
    %v223 = vshrl.u32 %v222, 7
    %v224 = vsub.s32 %v196, %v223
    %v225 = vrot.slane %v167, %v224
    %v226 = vlaneseq
    %v227 = vshrl.u32 %v226, 7
    %v228 = vsub.s32 %v201, %v227
    %v229 = vrot.slane %v168, %v228
    %v230 = vsel %vm206, %v229, %v225
    %v231 = vlaneseq
    %v232 = vshrl.u32 %v231, 7
    %v233 = vsub.s32 %v208, %v232
    %v234 = vrot.slane %v169, %v233
    %v235 = vsel %vm213, %v234, %v230
    %v236 = vlaneseq
    %v237 = vshrl.u32 %v236, 7
    %v238 = vsub.s32 %v215, %v237
    %v239 = vrot.slane %v170, %v238
    %v240 = vsel %vm220, %v239, %v235
    %v241 = vlaneseq
    %v242 = vshrl.u32 %v241, 7
    %v243 = vsub.s32 %v196, %v242
    %v244 = vrot.slane %v171, %v243
    %v245 = vlaneseq
    %v246 = vshrl.u32 %v245, 7
    %v247 = vsub.s32 %v201, %v246
    %v248 = vrot.slane %v172, %v247
    %v249 = vsel %vm206, %v248, %v244
    %v250 = vlaneseq
    %v251 = vshrl.u32 %v250, 7
    %v252 = vsub.s32 %v208, %v251
    %v253 = vrot.slane %v173, %v252
    %v254 = vsel %vm213, %v253, %v249
    %v255 = vlaneseq
    %v256 = vshrl.u32 %v255, 7
    %v257 = vsub.s32 %v215, %v256
    %v258 = vrot.slane %v174, %v257
    %v259 = vsel %vm220, %v258, %v254
    %v260 = vlaneseq
    %v261 = vshrl.u32 %v260, 7
    %v262 = vsub.s32 %v196, %v261
    %v263 = vrot.slane %v175, %v262
    %v264 = vlaneseq
    %v265 = vshrl.u32 %v264, 7
    %v266 = vsub.s32 %v201, %v265
    %v267 = vrot.slane %v176, %v266
    %v268 = vsel %vm206, %v267, %v263
    %v269 = vlaneseq
    %v270 = vshrl.u32 %v269, 7
    %v271 = vsub.s32 %v208, %v270
    %v272 = vrot.slane %v177, %v271
    %v273 = vsel %vm213, %v272, %v268
    %v274 = vlaneseq
    %v275 = vshrl.u32 %v274, 7
    %v276 = vsub.s32 %v215, %v275
    %v277 = vrot.slane %v178, %v276
    %v278 = vsel %vm220, %v277, %v273
    %vm279 = vcmask 1041409
    %v280 = vsel %vm279, %v240, %v221
    %vm281 = vcmask 1042434
    %v282 = vsel %vm281, %v259, %v280
    %vm283 = vcmask 1043459
    %v284 = vsel %vm283, %v278, %v282
    %v302 = vlaneseq
    %v303 = vshrl.u32 %v302, 7
    %v304 = vsub.s32 %v196, %v303
    %v305 = vrot.slane %v117, %v304
    %v306 = vlaneseq
    %v307 = vshrl.u32 %v306, 7
    %v308 = vsub.s32 %v201, %v307
    %v309 = vrot.slane %v120, %v308
    %v310 = vsel %vm206, %v309, %v305
    %v311 = vlaneseq
    %v312 = vshrl.u32 %v311, 7
    %v313 = vsub.s32 %v208, %v312
    %v314 = vrot.slane %v123, %v313
    %v315 = vsel %vm213, %v314, %v310
    %v316 = vlaneseq
    %v317 = vshrl.u32 %v316, 7
    %v318 = vsub.s32 %v215, %v317
    %v319 = vrot.slane %v126, %v318
    %v320 = vsel %vm220, %v319, %v315
    %v321 = vlaneseq
    %v322 = vshrl.u32 %v321, 7
    %v323 = vsub.s32 %v196, %v322
    %v324 = vrot.slane %v129, %v323
    %v325 = vlaneseq
    %v326 = vshrl.u32 %v325, 7
    %v327 = vsub.s32 %v201, %v326
    %v328 = vrot.slane %v132, %v327
    %v329 = vsel %vm206, %v328, %v324
    %v330 = vlaneseq
    %v331 = vshrl.u32 %v330, 7
    %v332 = vsub.s32 %v208, %v331
    %v333 = vrot.slane %v135, %v332
    %v334 = vsel %vm213, %v333, %v329
    %v335 = vlaneseq
    %v336 = vshrl.u32 %v335, 7
    %v337 = vsub.s32 %v215, %v336
    %v338 = vrot.slane %v138, %v337
    %v339 = vsel %vm220, %v338, %v334
    %v340 = vlaneseq
    %v341 = vshrl.u32 %v340, 7
    %v342 = vsub.s32 %v196, %v341
    %v343 = vrot.slane %v141, %v342
    %v344 = vlaneseq
    %v345 = vshrl.u32 %v344, 7
    %v346 = vsub.s32 %v201, %v345
    %v347 = vrot.slane %v144, %v346
    %v348 = vsel %vm206, %v347, %v343
    %v349 = vlaneseq
    %v350 = vshrl.u32 %v349, 7
    %v351 = vsub.s32 %v208, %v350
    %v352 = vrot.slane %v147, %v351
    %v353 = vsel %vm213, %v352, %v348
    %v354 = vlaneseq
    %v355 = vshrl.u32 %v354, 7
    %v356 = vsub.s32 %v215, %v355
    %v357 = vrot.slane %v150, %v356
    %v358 = vsel %vm220, %v357, %v353
    %v359 = vlaneseq
    %v360 = vshrl.u32 %v359, 7
    %v361 = vsub.s32 %v196, %v360
    %v362 = vrot.slane %v153, %v361
    %v363 = vlaneseq
    %v364 = vshrl.u32 %v363, 7
    %v365 = vsub.s32 %v201, %v364
    %v366 = vrot.slane %v156, %v365
    %v367 = vsel %vm206, %v366, %v362
    %v368 = vlaneseq
    %v369 = vshrl.u32 %v368, 7
    %v370 = vsub.s32 %v208, %v369
    %v371 = vrot.slane %v159, %v370
    %v372 = vsel %vm213, %v371, %v367
    %v373 = vlaneseq
    %v374 = vshrl.u32 %v373, 7
    %v375 = vsub.s32 %v215, %v374
    %v376 = vrot.slane %v162, %v375
    %v377 = vsel %vm220, %v376, %v372
    %vm378 = vcmask 1045509
    %v379 = vsel %vm378, %v339, %v320
    %vm380 = vcmask 1046534
    %v381 = vsel %vm380, %v358, %v379
    %vm382 = vcmask 1047559
    %v383 = vsel %vm382, %v377, %v381
    %vm385 = vcmask 1043456
    %v386 = vsel %vm385, %v284, %v383
    %v387 = vld [vmem:[%s1] sm:$0xff]
    %v388 = vld [vmem:[%s1 + $0x8] sm:$0xff]
    %v389 = vld [vmem:[%s1 + $0x10] sm:$0xff]
    %v390 = vld [vmem:[%s1 + $0x18] sm:$0xff]
    %v391 = vld [vmem:[%s2] sm:$0x1]
    %v393 = vlaneseq
    %v394 = vshrl.u32 %v393, 7
    %v395 = vsub.s32 0, %v394
    %v396 = vrot.slane %v391, %v395
    %vm398 = vcmask 261120
    %v400 = vsel %vm398, %v386, 0
    %402 = vmatprep.subr.mxu0 0.0
    %403 = vmatpush1.msra.mxu0 %v387
    %404 = vmatprep.subr.mxu0 0.0
    %405 = vmatpush1.msra.mxu0 %v388
    %406 = vmatprep.subr.mxu0 0.0
    %407 = vmatpush1.msra.mxu0 %v389
    %408 = vmatprep.subr.mxu0 0.0
    %409 = vmatpush1.msra.mxu0 %v390
    %410 = vmatprep.subr.mxu0 0.0
    %411 = vmatpush1.msra.mxu0 0.0
    %412 = vmatprep.subr.mxu0 0.0
    %413 = vmatpush1.msra.mxu0 0.0
    %414 = vmatprep.subr.mxu0 0.0
    %415 = vmatpush1.msra.mxu0 0.0
    %416 = vmatprep.subr.mxu0 0.0
    %417 = vmatpush1.msra.mxu0 0.0
    %418 = vmatprep.subr.mxu0 0.0
    %419 = vmatpush1.msra.mxu0 0.0
    %420 = vmatprep.subr.mxu0 0.0
    %421 = vmatpush1.msra.mxu0 0.0
    %422 = vmatprep.subr.mxu0 0.0
    %423 = vmatpush1.msra.mxu0 0.0
    %424 = vmatprep.subr.mxu0 0.0
    %425 = vmatpush1.msra.mxu0 0.0
    %426 = vmatprep.subr.mxu0 0.0
    %427 = vmatpush1.msra.mxu0 0.0
    %428 = vmatprep.subr.mxu0 0.0
    %429 = vmatpush1.msra.mxu0 0.0
    %430 = vmatprep.subr.mxu0 0.0
    %431 = vmatpush1.msra.mxu0 0.0
    %432 = vmatprep.subr.mxu0 0.0
    %433 = vmatpush1.msra.mxu0 0.0
    %434 = vmatprep.subr.mxu0 0.0
    %435 = vmatpush1.msra.mxu0 0.0
    %436 = vmatprep.subr.mxu0 0.0
    %437 = vmatpush1.msra.mxu0 0.0
    %438 = vmatprep.subr.mxu0 0.0
    %439 = vmatpush1.msra.mxu0 0.0
    %440 = vmatprep.subr.mxu0 0.0
    %441 = vmatpush1.msra.mxu0 0.0
    %442 = vmatprep.subr.mxu0 0.0
    %443 = vmatpush1.msra.mxu0 0.0
    %444 = vmatprep.subr.mxu0 0.0
    %445 = vmatpush1.msra.mxu0 0.0
    %446 = vmatprep.subr.mxu0 0.0
    %447 = vmatpush1.msra.mxu0 0.0
    %448 = vmatprep.subr.mxu0 0.0
    %449 = vmatpush1.msra.mxu0 0.0
    %450 = vmatprep.subr.mxu0 0.0
    %451 = vmatpush1.msra.mxu0 0.0
    %452 = vmatprep.subr.mxu0 0.0
    %453 = vmatpush1.msra.mxu0 0.0
    %454 = vmatprep.subr.mxu0 0.0
    %455 = vmatpush1.msra.mxu0 0.0
    %456 = vmatprep.subr.mxu0 0.0
    %457 = vmatpush1.msra.mxu0 0.0
    %458 = vmatprep.subr.mxu0 0.0
    %459 = vmatpush1.msra.mxu0 0.0
    %460 = vmatprep.subr.mxu0 0.0
    %461 = vmatpush1.msra.mxu0 0.0
    %462 = vmatprep.subr.mxu0 0.0
    %463 = vmatpush1.msra.mxu0 0.0
    %464 = vmatprep.subr.mxu0 0.0
    %465 = vmatpush1.msra.mxu0 0.0
    %466 = vmatprep.mubr.f32.mxu0 0.0
    %467 = vmatmul.mubr.f32.gmra.mrb[0].mxu0 %v400
    %v468 = vpop.f32.mrb[0].mxu0
    %v469 = vadd.f32 %v396, %v468
    %v470 = vpop.f32.mrb[0].mxu0
    %471 = vdwg.mxu0
    %v472 = vmax.f32 %v469, 0.0
    %v473 = vld [vmem:[%s3] sm:$0x3]
    %v474 = vld [vmem:[%s4] sm:$0x1]
    %v476 = vlaneseq
    %v477 = vshrl.u32 %v476, 7
    %v478 = vsub.s32 0, %v477
    %v479 = vrot.slane %v474, %v478
    %vm481 = vcmask 15360
    %v483 = vsel %vm481, %v472, 0
    %vm485 = vcmask 1041408
    %v487 = vsel %vm485, %v473, 0
    %489 = vmatprep.subr.mxu0 0.0
    %490 = vmatpush1.msra.mxu0 %v487
    %491 = vmatprep.subr.mxu0 0.0
    %492 = vmatpush1.msra.mxu0 0.0
    %493 = vmatprep.subr.mxu0 0.0
    %494 = vmatpush1.msra.mxu0 0.0
    %495 = vmatprep.subr.mxu0 0.0
    %496 = vmatpush1.msra.mxu0 0.0
    %497 = vmatprep.subr.mxu0 0.0
    %498 = vmatpush1.msra.mxu0 0.0
    %499 = vmatprep.subr.mxu0 0.0
    %500 = vmatpush1.msra.mxu0 0.0
    %501 = vmatprep.subr.mxu0 0.0
    %502 = vmatpush1.msra.mxu0 0.0
    %503 = vmatprep.subr.mxu0 0.0
    %504 = vmatpush1.msra.mxu0 0.0
    %505 = vmatprep.subr.mxu0 0.0
    %506 = vmatpush1.msra.mxu0 0.0
    %507 = vmatprep.subr.mxu0 0.0
    %508 = vmatpush1.msra.mxu0 0.0
    %509 = vmatprep.subr.mxu0 0.0
    %510 = vmatpush1.msra.mxu0 0.0
    %511 = vmatprep.subr.mxu0 0.0
    %512 = vmatpush1.msra.mxu0 0.0
    %513 = vmatprep.subr.mxu0 0.0
    %514 = vmatpush1.msra.mxu0 0.0
    %515 = vmatprep.subr.mxu0 0.0
    %516 = vmatpush1.msra.mxu0 0.0
    %517 = vmatprep.subr.mxu0 0.0
    %518 = vmatpush1.msra.mxu0 0.0
    %519 = vmatprep.subr.mxu0 0.0
    %520 = vmatpush1.msra.mxu0 0.0
    %521 = vmatprep.subr.mxu0 0.0
    %522 = vmatpush1.msra.mxu0 0.0
    %523 = vmatprep.subr.mxu0 0.0
    %524 = vmatpush1.msra.mxu0 0.0
    %525 = vmatprep.subr.mxu0 0.0
    %526 = vmatpush1.msra.mxu0 0.0
    %527 = vmatprep.subr.mxu0 0.0
    %528 = vmatpush1.msra.mxu0 0.0
    %529 = vmatprep.subr.mxu0 0.0
    %530 = vmatpush1.msra.mxu0 0.0
    %531 = vmatprep.subr.mxu0 0.0
    %532 = vmatpush1.msra.mxu0 0.0
    %533 = vmatprep.subr.mxu0 0.0
    %534 = vmatpush1.msra.mxu0 0.0
    %535 = vmatprep.subr.mxu0 0.0
    %536 = vmatpush1.msra.mxu0 0.0
    %537 = vmatprep.subr.mxu0 0.0
    %538 = vmatpush1.msra.mxu0 0.0
    %539 = vmatprep.subr.mxu0 0.0
    %540 = vmatpush1.msra.mxu0 0.0
    %541 = vmatprep.subr.mxu0 0.0
    %542 = vmatpush1.msra.mxu0 0.0
    %543 = vmatprep.subr.mxu0 0.0
    %544 = vmatpush1.msra.mxu0 0.0
    %545 = vmatprep.subr.mxu0 0.0
    %546 = vmatpush1.msra.mxu0 0.0
    %547 = vmatprep.subr.mxu0 0.0
    %548 = vmatpush1.msra.mxu0 0.0
    %549 = vmatprep.subr.mxu0 0.0
    %550 = vmatpush1.msra.mxu0 0.0
    %551 = vmatprep.subr.mxu0 0.0
    %552 = vmatpush1.msra.mxu0 0.0
    %553 = vmatprep.mubr.f32.mxu0 0.0
    %554 = vmatmul.mubr.f32.gmra.mrb[0].mxu0 %v483
    %v555 = vpop.f32.mrb[0].mxu0
    %v556 = vadd.f32 %v479, %v555
    %v557 = vpop.f32.mrb[0].mxu0
    %558 = vdwg.mxu0
    %v560 = vrot.slane %v556, 4
    %v562 = vadd.f32 %v556, %v560
    %v563 = vxor.u32 %v562, 2147483648
    %v564 = vmul.f32 %v563, 1.442695
    %v565 = vpow.pop %v564
    %v566 = vadd.f32 %v565, 1.0
    %v567 = vrcp.pop %v566
    %v568 = vmul.f32 1.0, %v567
    %v569 = vlaneseq
    %v570 = vshrl.u32 %v569, 7
    %v571 = vsub.s32 0, %v570
    %v572 = vrot.slane %v568, %v571
    %574 = vbcast.lane.b32.xlu0 %v572, 256
    %v575 = vpop.permute.xlu0 %574
    %s577 = sor.u32 256, 8
    %578 = vbcast.lane.b32.xlu0 %v572, %s577
    %v579 = vpop.permute.xlu0 %578
    %s581 = sor.u32 256, 16
    %582 = vbcast.lane.b32.xlu0 %v572, %s581
    %v583 = vpop.permute.xlu0 %582
    %s585 = sor.u32 256, 24
    %586 = vbcast.lane.b32.xlu0 %v572, %s585
    %v587 = vpop.permute.xlu0 %586
    %v588 = vlaneseq
    %v589 = vshrl.u32 %v588, 7
    %v590 = vsub.s32 1, %v589
    %v591 = vrot.slane %v568, %v590
    %593 = vbcast.lane.b32.xlu0 %v591, 256
    %v594 = vpop.permute.xlu0 %593
    %s596 = sor.u32 256, 8
    %597 = vbcast.lane.b32.xlu0 %v591, %s596
    %v598 = vpop.permute.xlu0 %597
    %s600 = sor.u32 256, 16
    %601 = vbcast.lane.b32.xlu0 %v591, %s600
    %v602 = vpop.permute.xlu0 %601
    %s604 = sor.u32 256, 24
    %605 = vbcast.lane.b32.xlu0 %v591, %s604
    %v606 = vpop.permute.xlu0 %605
    %v607 = vlaneseq
    %v608 = vshrl.u32 %v607, 7
    %v609 = vsub.s32 2, %v608
    %v610 = vrot.slane %v568, %v609
    %612 = vbcast.lane.b32.xlu0 %v610, 256
    %v613 = vpop.permute.xlu0 %612
    %s615 = sor.u32 256, 8
    %616 = vbcast.lane.b32.xlu0 %v610, %s615
    %v617 = vpop.permute.xlu0 %616
    %s619 = sor.u32 256, 16
    %620 = vbcast.lane.b32.xlu0 %v610, %s619
    %v621 = vpop.permute.xlu0 %620
    %s623 = sor.u32 256, 24
    %624 = vbcast.lane.b32.xlu0 %v610, %s623
    %v625 = vpop.permute.xlu0 %624
    %v626 = vlaneseq
    %v627 = vshrl.u32 %v626, 7
    %v628 = vsub.s32 3, %v627
    %v629 = vrot.slane %v568, %v628
    %631 = vbcast.lane.b32.xlu0 %v629, 256
    %v632 = vpop.permute.xlu0 %631
    %s634 = sor.u32 256, 8
    %635 = vbcast.lane.b32.xlu0 %v629, %s634
    %v636 = vpop.permute.xlu0 %635
    %s638 = sor.u32 256, 16
    %639 = vbcast.lane.b32.xlu0 %v629, %s638
    %v640 = vpop.permute.xlu0 %639
    %s642 = sor.u32 256, 24
    %643 = vbcast.lane.b32.xlu0 %v629, %s642
    %v644 = vpop.permute.xlu0 %643
    %v645 = vmul.f32 %v35, %v575
    %v646 = vmul.f32 %v36, %v575
    %v647 = vmul.f32 %v37, %v579
    %v648 = vmul.f32 %v38, %v579
    %v649 = vmul.f32 %v39, %v583
    %v650 = vmul.f32 %v40, %v583
    %v651 = vmul.f32 %v41, %v587
    %v652 = vmul.f32 %v42, %v587
    %v653 = vmul.f32 %v43, %v594
    %v654 = vmul.f32 %v44, %v594
    %v655 = vmul.f32 %v45, %v598
    %v656 = vmul.f32 %v46, %v598
    %v657 = vmul.f32 %v47, %v602
    %v658 = vmul.f32 %v48, %v602
    %v659 = vmul.f32 %v49, %v606
    %v660 = vmul.f32 %v50, %v606
    %v661 = vmul.f32 %v51, %v613
    %v662 = vmul.f32 %v52, %v613
    %v663 = vmul.f32 %v53, %v617
    %v664 = vmul.f32 %v54, %v617
    %v665 = vmul.f32 %v55, %v621
    %v666 = vmul.f32 %v56, %v621
    %v667 = vmul.f32 %v57, %v625
    %v668 = vmul.f32 %v58, %v625
    %v669 = vmul.f32 %v59, %v632
    %v670 = vmul.f32 %v60, %v632
    %v671 = vmul.f32 %v61, %v636
    %v672 = vmul.f32 %v62, %v636
    %v673 = vmul.f32 %v63, %v640
    %v674 = vmul.f32 %v64, %v640
    %v675 = vmul.f32 %v65, %v644
    %v676 = vmul.f32 %v66, %v644
    %677 = vst [vmem:[#allocation5] sm:$0xff] %v645
    %678 = vst [vmem:[#allocation5 + $0x8] sm:$0xff] %v646
    %679 = vst [vmem:[#allocation5 + $0x10] sm:$0xff] %v647
    %680 = vst [vmem:[#allocation5 + $0x18] sm:$0xff] %v648
    %681 = vst [vmem:[#allocation5 + $0x20] sm:$0xff] %v649
    %682 = vst [vmem:[#allocation5 + $0x28] sm:$0xff] %v650
    %683 = vst [vmem:[#allocation5 + $0x30] sm:$0xff] %v651
    %684 = vst [vmem:[#allocation5 + $0x38] sm:$0xff] %v652
    %685 = vst [vmem:[#allocation5 + $0x40] sm:$0xff] %v653
    %686 = vst [vmem:[#allocation5 + $0x48] sm:$0xff] %v654
    %687 = vst [vmem:[#allocation5 + $0x50] sm:$0xff] %v655
    %688 = vst [vmem:[#allocation5 + $0x58] sm:$0xff] %v656
    %689 = vst [vmem:[#allocation5 + $0x60] sm:$0xff] %v657
    %690 = vst [vmem:[#allocation5 + $0x68] sm:$0xff] %v658
    %691 = vst [vmem:[#allocation5 + $0x70] sm:$0xff] %v659
    %692 = vst [vmem:[#allocation5 + $0x78] sm:$0xff] %v660
    %693 = vst [vmem:[#allocation5 + $0x80] sm:$0xff] %v661
    %694 = vst [vmem:[#allocation5 + $0x88] sm:$0xff] %v662
    %695 = vst [vmem:[#allocation5 + $0x90] sm:$0xff] %v663
    %696 = vst [vmem:[#allocation5 + $0x98] sm:$0xff] %v664
    %697 = vst [vmem:[#allocation5 + $0xa0] sm:$0xff] %v665
    %698 = vst [vmem:[#allocation5 + $0xa8] sm:$0xff] %v666
    %699 = vst [vmem:[#allocation5 + $0xb0] sm:$0xff] %v667
    %700 = vst [vmem:[#allocation5 + $0xb8] sm:$0xff] %v668
    %701 = vst [vmem:[#allocation5 + $0xc0] sm:$0xff] %v669
    %702 = vst [vmem:[#allocation5 + $0xc8] sm:$0xff] %v670
    %703 = vst [vmem:[#allocation5 + $0xd0] sm:$0xff] %v671
    %704 = vst [vmem:[#allocation5 + $0xd8] sm:$0xff] %v672
    %705 = vst [vmem:[#allocation5 + $0xe0] sm:$0xff] %v673
    %706 = vst [vmem:[#allocation5 + $0xe8] sm:$0xff] %v674
    %707 = vst [vmem:[#allocation5 + $0xf0] sm:$0xff] %v675
    %708 = vst [vmem:[#allocation5 + $0xf8] sm:$0xff] %v676
    // Predicated region
    $region26: #{tpu_custom_call.1} parent=1 // pred_check
      _
    $region27: #{tpu_custom_call.1} parent=1 // pred_check_branch
      %710 = sbr.rel (0) target = $region29
    $region28: #{tpu_custom_call.1} parent=1 // pred_region
      %s712 = ssub.s32 4096, 4096
      %713 = vsyncadd [#allocation4], %s712
      %s714 = sshll.u32 [#allocation5], 4
      %s715 = int_to_ptr.vmem [resolvable:$true] %s714
      %720 = dma.vmem_to_hbm [thread:$0]  %s715, 4096, %s5, [#allocation4], 256, 256, 16
    $region29: #{tpu_custom_call.1} parent=1 // pred_fallthru
      _
    // Predicated region
    $region30: #{tpu_custom_call.1} parent=1 // pred_check
      _
    $region31: #{tpu_custom_call.1} parent=1 // pred_check_branch
      %722 = sbr.rel (0) target = $region33
    $region32: #{tpu_custom_call.1} parent=1 // pred_region
      %723 = dma.done [#allocation4], 4096
    $region33: #{tpu_custom_call.1} parent=1 // pred_fallthru
      _
    %724 = vsyncpa [#allocation3], 1
    %725 = vsyncpa [#allocation4], 1

</llo_original>
